<compile_context>
chip_gen: v7x
topology: tpu7x:2x2x1
jax: 0.10.0
libtpu: 0.0.40
codegen_flags: <defaults>
</compile_context>

<pallas_src>
import jax
import jax.numpy as jnp
from jax.experimental import pallas as pl
from jax.experimental.pallas import tpu as pltpu

IN_F = 120
OUT_F = 84


def _round_up(a, m):
    return ((a + m - 1) // m) * m


def linear_relu_kernel(x_ref, w_ref, b_ref, o_ref):
    # x_ref: (tm, 120), w_ref: (120, 84), b_ref: (1, 84), o_ref: (tm, 84)
    y = jnp.dot(x_ref[...], w_ref[...], preferred_element_type=jnp.float32)
    y = y + b_ref[...]                       # broadcast bias over rows
    o_ref[...] = jnp.maximum(y, 0.0).astype(o_ref.dtype)


def f4_forward(x, w_t, b, *, tm=8192):
    """x: (B, 120) f32, w_t: (120, 84) f32, b: (1, 84) or (84,) f32 -> (B, 84) f32."""
    B = x.shape[0]
    b2 = jnp.reshape(b, (1, OUT_F)).astype(jnp.float32)

    # Row tile: big enough to amortize the ~0.35 us/step pipeline overhead,
    # small enough that the grid has >= ~4 steps for large batches so the
    # "parallel" axis can shard across v7x's two TensorCores.
    tm_eff = min(int(tm), _round_up(pl.cdiv(B, 4), 8))
    tm_eff = max(8, _round_up(tm_eff, 8))

    grid = (pl.cdiv(B, tm_eff),)   # partial last block handled by Pallas

    out = pl.pallas_call(
        linear_relu_kernel,
        out_shape=jax.ShapeDtypeStruct((B, OUT_F), jnp.float32),
        grid_spec=pltpu.PrefetchScalarGridSpec(
            num_scalar_prefetch=0,
            grid=grid,
            in_specs=[
                pl.BlockSpec((tm_eff, IN_F), lambda i: (i, 0)),   # x row tile (full K)
                pl.BlockSpec((IN_F, OUT_F), lambda i: (0, 0)),    # full weight, VMEM-resident
                pl.BlockSpec((1, OUT_F), lambda i: (0, 0)),       # bias
            ],
            out_specs=pl.BlockSpec((tm_eff, OUT_F), lambda i: (i, 0)),
        ),
        compiler_params=pltpu.CompilerParams(
            dimension_semantics=("parallel",)),
    )(x, w_t, b2)

    return out


def init_params(key):
    """Deterministic init mirroring nn.Linear default (uniform +/- 1/sqrt(in_f))."""
    kw, kb = jax.random.split(key)
    bound = 1.0 / jnp.sqrt(jnp.float32(IN_F))
    # PyTorch stores weight as (out_f, in_f); we keep the transposed (in_f, out_f)
    # copy so the kernel computes x @ W directly (== x @ W_pt.T).
    w = jax.random.uniform(kw, (OUT_F, IN_F), jnp.float32, -bound, bound)
    b = jax.random.uniform(kb, (OUT_F,), jnp.float32, -bound, bound)
    return w.T, b.reshape(1, OUT_F)


if __name__ == "__main__":
    key = jax.random.PRNGKey(0)
    k_x, k_x2, k_x3, k_p = jax.random.split(key, 4)

    w_t, b = init_params(k_p)

    # Small batch (single grid step).
    B1 = 8
    x1 = jax.random.normal(k_x, (B1, IN_F), jnp.float32)
    out1 = jax.block_until_ready(f4_forward(x1, w_t, b))
    ref1 = jnp.maximum(x1 @ w_t + b, 0.0)
    assert out1.shape == (B1, OUT_F)
    assert jnp.allclose(out1, ref1, atol=1e-5, rtol=1e-5)

    # Non-multiple-of-8 batch (exercises the partial-last-block / cdiv-grid path).
    B2 = 10
    x2 = jax.random.normal(k_x2, (B2, IN_F), jnp.float32)
    out2 = jax.block_until_ready(f4_forward(x2, w_t, b))
    ref2 = jnp.maximum(x2 @ w_t + b, 0.0)
    assert out2.shape == (B2, OUT_F)
    assert jnp.allclose(out2, ref2, atol=1e-5, rtol=1e-5)

    # Slightly larger odd batch (multi-step grid + partial edge block).
    B3 = 37
    x3 = jax.random.normal(k_x3, (B3, IN_F), jnp.float32)
    out3 = jax.block_until_ready(f4_forward(x3, w_t, b))
    ref3 = jnp.maximum(x3 @ w_t + b, 0.0)
    assert out3.shape == (B3, OUT_F)
    assert jnp.allclose(out3, ref3, atol=1e-5, rtol=1e-5)

    print("KERNEL_OK")
</pallas_src>

<mosaic_0001>
module attributes {stable_mosaic.version = 11 : i64} {
  func.func @linear_relu_kernel(%arg0: i32, %arg1: memref<8x120xf32, #tpu.memory_space<vmem>>, %arg2: memref<120x84xf32, #tpu.memory_space<vmem>>, %arg3: memref<1x84xf32, #tpu.memory_space<vmem>>, %arg4: memref<8x84xf32, #tpu.memory_space<vmem>>) attributes {dimension_semantics = [#tpu.dimension_semantics<parallel>], iteration_bounds = array<i64: 1>, scalar_prefetch = 0 : i64, scratch_operands = 0 : i64, tpu.core_type = #tpu.core_type<tc>, window_params = [{transform_indices = @transform_0, window_bounds = array<i64: 8, 120>}, {pipeline_mode = #tpu.pipeline_mode<synchronous>, transform_indices = @transform_1, window_bounds = array<i64: 120, 84>}, {pipeline_mode = #tpu.pipeline_mode<synchronous>, transform_indices = @transform_2, window_bounds = array<i64: 1, 84>}, {transform_indices = @transform_3, window_bounds = array<i64: 8, 84>}]} {
    %c0 = arith.constant 0 : index
    %c0_0 = arith.constant 0 : index
    %0 = vector.load %arg1[%c0, %c0_0] : memref<8x120xf32, #tpu.memory_space<vmem>>, vector<8x120xf32>
    %c0_1 = arith.constant 0 : index
    %c0_2 = arith.constant 0 : index
    %1 = vector.load %arg2[%c0_1, %c0_2] : memref<120x84xf32, #tpu.memory_space<vmem>>, vector<120x84xf32>
    %cst = arith.constant dense<0.000000e+00> : vector<8x84xf32>
    %2 = tpu.matmul %0, %1, %cst {dimension_numbers = #tpu.dot_dimension_numbers<[1], [0], [0], [1], [0, 0, 1, 1], [], []>} : vector<8x120xf32>, vector<120x84xf32>, vector<8x84xf32> -> vector<8x84xf32>
    %c0_3 = arith.constant 0 : index
    %c0_4 = arith.constant 0 : index
    %3 = vector.load %arg3[%c0_3, %c0_4] : memref<1x84xf32, #tpu.memory_space<vmem>>, vector<1x84xf32>
    %4 = vector.broadcast %3 : vector<1x84xf32> to vector<8x84xf32>
    %5 = arith.addf %2, %4 : vector<8x84xf32>
    %cst_5 = arith.constant 0.000000e+00 : f32
    %6 = vector.broadcast %cst_5 : f32 to vector<8x84xf32>
    %7 = arith.maximumf %5, %6 : vector<8x84xf32>
    %c0_6 = arith.constant 0 : index
    %c0_7 = arith.constant 0 : index
    %8 = vector.load %arg4[%c0_6, %c0_7] : memref<8x84xf32, #tpu.memory_space<vmem>>, vector<8x84xf32>
    tpu.vector_store %arg4[%c0_6, %c0_7], %7 {strides = array<i32>} : memref<8x84xf32, #tpu.memory_space<vmem>>, vector<8x84xf32>,
    return
  }
  func.func @transform_0(%arg0: i32) -> (i32, i32) {
    %c0_i32 = arith.constant 0 : i32
    %c0_i32_0 = arith.constant 0 : i32
    return %arg0, %c0_i32 : i32, i32
  }
  func.func @transform_1(%arg0: i32) -> (i32, i32) {
    %c0_i32 = arith.constant 0 : i32
    %c0_i32_0 = arith.constant 0 : i32
    %c0_i32_1 = arith.constant 0 : i32
    return %c0_i32, %c0_i32_0 : i32, i32
  }
  func.func @transform_2(%arg0: i32) -> (i32, i32) {
    %c0_i32 = arith.constant 0 : i32
    %c0_i32_0 = arith.constant 0 : i32
    %c0_i32_1 = arith.constant 0 : i32
    return %c0_i32, %c0_i32_0 : i32, i32
  }
  func.func @transform_3(%arg0: i32) -> (i32, i32) {
    %c0_i32 = arith.constant 0 : i32
    %c0_i32_0 = arith.constant 0 : i32
    return %arg0, %c0_i32 : i32, i32
  }
}

</mosaic_0001>

<llo_original>
// kernel: tpu_custom_call.1
$region0: #{tpu_custom_call.1}
  #allocation0 [shape = 'u32[]', space=smem, size = 0x4, offset = 0x4, fixed_abs, tag = 'smem constant byte address 0x4 - core index']
  #allocation1 [shape = 'u32[144,128]{1,0:T(1,128)}', space=vmem, size = 0x12000, scoped, tag = 'internal scratch']
  %s0 = inlined_call_operand.vmem [shape: f32[8,120], index: 0, kind: input, shape index: {}]
  %s1 = inlined_call_operand.vmem [shape: f32[120,84], index: 1, kind: input, shape index: {}]
  %s2 = inlined_call_operand.vmem [shape: f32[1,84], index: 2, kind: input, shape index: {}]
  %s3 = inlined_call_operand.hbm [shape: f32[8,84], index: 3, kind: output, shape index: {}]
  %s4 = sld [smem:[#allocation0]]
  $region22: #{tpu_custom_call.1} parent=0
    _
  %s6 = ssub.s32 1, %s4
  %s7 = scalar_select 0, %s6, %s4
  $region1: #{tpu_custom_call.1} parent=0
    #allocation2 [shape = 'u8[4096]{0}', space=vmem, size = 0x1000, scoped, tag = 'output window, operand 0, single buffered']
    #allocation3 [shape = 's32[1]{0}', space=sflag, size = 0x4, scoped, tag = 'scoped memory for tpu_custom_call.1']
    %8 = vsyncpa [#allocation3], 0
    // Predicated region
    $region2: #{tpu_custom_call.1} parent=1 // pred_check
      _
    $region3: #{tpu_custom_call.1} parent=1 // pred_check_branch
      %10 = sbr.rel (0) target = $region5
    $region4: #{tpu_custom_call.1} parent=1 // pred_region
      _
    $region5: #{tpu_custom_call.1} parent=1 // pred_fallthru
      _
    // Predicated region
    $region6: #{tpu_custom_call.1} parent=1 // pred_check
      _
    $region7: #{tpu_custom_call.1} parent=1 // pred_check_branch
      %12 = sbr.rel (0) target = $region9
    $region8: #{tpu_custom_call.1} parent=1 // pred_region
      _
    $region9: #{tpu_custom_call.1} parent=1 // pred_fallthru
      _
    // Predicated region
    $region10: #{tpu_custom_call.1} parent=1 // pred_check
      _
    $region11: #{tpu_custom_call.1} parent=1 // pred_check_branch
      %14 = sbr.rel (0) target = $region13
    $region12: #{tpu_custom_call.1} parent=1 // pred_region
      _
    $region13: #{tpu_custom_call.1} parent=1 // pred_fallthru
      _
    %v15 = vld [vmem:[%s0] sm:$0xff]
    %v16 = vld [vmem:[%s1] sm:$0xff]
    %v17 = vld [vmem:[%s1 + $0x8] sm:$0xff]
    %v18 = vld [vmem:[%s1 + $0x10] sm:$0xff]
    %v19 = vld [vmem:[%s1 + $0x18] sm:$0xff]
    %v20 = vld [vmem:[%s1 + $0x20] sm:$0xff]
    %v21 = vld [vmem:[%s1 + $0x28] sm:$0xff]
    %v22 = vld [vmem:[%s1 + $0x30] sm:$0xff]
    %v23 = vld [vmem:[%s1 + $0x38] sm:$0xff]
    %v24 = vld [vmem:[%s1 + $0x40] sm:$0xff]
    %v25 = vld [vmem:[%s1 + $0x48] sm:$0xff]
    %v26 = vld [vmem:[%s1 + $0x50] sm:$0xff]
    %v27 = vld [vmem:[%s1 + $0x58] sm:$0xff]
    %v28 = vld [vmem:[%s1 + $0x60] sm:$0xff]
    %v29 = vld [vmem:[%s1 + $0x68] sm:$0xff]
    %v30 = vld [vmem:[%s1 + $0x70] sm:$0xff]
    %v31 = vld [vmem:[%s2] sm:$0x1]
    %v33 = vlaneseq
    %v34 = vshrl.u32 %v33, 7
    %v35 = vsub.s32 0, %v34
    %v36 = vrot.slane %v31, %v35
    %vm38 = vcmask 982016
    %v40 = vsel %vm38, %v15, 0
    %42 = vmatprep.subr.mxu0 0.0
    %43 = vmatpush1.msra.mxu0 %v16
    %44 = vmatprep.subr.mxu0 0.0
    %45 = vmatpush1.msra.mxu0 %v17
    %46 = vmatprep.subr.mxu0 0.0
    %47 = vmatpush1.msra.mxu0 %v18
    %48 = vmatprep.subr.mxu0 0.0
    %49 = vmatpush1.msra.mxu0 %v19
    %50 = vmatprep.subr.mxu0 0.0
    %51 = vmatpush1.msra.mxu0 %v20
    %52 = vmatprep.subr.mxu0 0.0
    %53 = vmatpush1.msra.mxu0 %v21
    %54 = vmatprep.subr.mxu0 0.0
    %55 = vmatpush1.msra.mxu0 %v22
    %56 = vmatprep.subr.mxu0 0.0
    %57 = vmatpush1.msra.mxu0 %v23
    %58 = vmatprep.subr.mxu0 0.0
    %59 = vmatpush1.msra.mxu0 %v24
    %60 = vmatprep.subr.mxu0 0.0
    %61 = vmatpush1.msra.mxu0 %v25
    %62 = vmatprep.subr.mxu0 0.0
    %63 = vmatpush1.msra.mxu0 %v26
    %64 = vmatprep.subr.mxu0 0.0
    %65 = vmatpush1.msra.mxu0 %v27
    %66 = vmatprep.subr.mxu0 0.0
    %67 = vmatpush1.msra.mxu0 %v28
    %68 = vmatprep.subr.mxu0 0.0
    %69 = vmatpush1.msra.mxu0 %v29
    %70 = vmatprep.subr.mxu0 0.0
    %71 = vmatpush1.msra.mxu0 %v30
    %72 = vmatprep.subr.mxu0 0.0
    %73 = vmatpush1.msra.mxu0 0.0
    %74 = vmatprep.subr.mxu0 0.0
    %75 = vmatpush1.msra.mxu0 0.0
    %76 = vmatprep.subr.mxu0 0.0
    %77 = vmatpush1.msra.mxu0 0.0
    %78 = vmatprep.subr.mxu0 0.0
    %79 = vmatpush1.msra.mxu0 0.0
    %80 = vmatprep.subr.mxu0 0.0
    %81 = vmatpush1.msra.mxu0 0.0
    %82 = vmatprep.subr.mxu0 0.0
    %83 = vmatpush1.msra.mxu0 0.0
    %84 = vmatprep.subr.mxu0 0.0
    %85 = vmatpush1.msra.mxu0 0.0
    %86 = vmatprep.subr.mxu0 0.0
    %87 = vmatpush1.msra.mxu0 0.0
    %88 = vmatprep.subr.mxu0 0.0
    %89 = vmatpush1.msra.mxu0 0.0
    %90 = vmatprep.subr.mxu0 0.0
    %91 = vmatpush1.msra.mxu0 0.0
    %92 = vmatprep.subr.mxu0 0.0
    %93 = vmatpush1.msra.mxu0 0.0
    %94 = vmatprep.subr.mxu0 0.0
    %95 = vmatpush1.msra.mxu0 0.0
    %96 = vmatprep.subr.mxu0 0.0
    %97 = vmatpush1.msra.mxu0 0.0
    %98 = vmatprep.subr.mxu0 0.0
    %99 = vmatpush1.msra.mxu0 0.0
    %100 = vmatprep.subr.mxu0 0.0
    %101 = vmatpush1.msra.mxu0 0.0
    %102 = vmatprep.subr.mxu0 0.0
    %103 = vmatpush1.msra.mxu0 0.0
    %104 = vmatprep.subr.mxu0 0.0
    %105 = vmatpush1.msra.mxu0 0.0
    %106 = vmatprep.mubr.f32.mxu0 0.0
    %107 = vmatmul.mubr.f32.gmra.mrb[0].mxu0 %v40
    %v108 = vpop.f32.mrb[0].mxu0
    %v109 = vadd.f32 %v36, %v108
    %v110 = vpop.f32.mrb[0].mxu0
    %111 = vdwg.mxu0
    %v112 = vmax.f32 %v109, 0.0
    %vm113 = vcmask 687104
    %114 = vst.msk [vmem:[#allocation2] sm:$0xff] %vm113, %v112
    // Predicated region
    $region14: #{tpu_custom_call.1} parent=1 // pred_check
      _
    $region15: #{tpu_custom_call.1} parent=1 // pred_check_branch
      %116 = sbr.rel (0) target = $region17
    $region16: #{tpu_custom_call.1} parent=1 // pred_region
      %s118 = ssub.s32 128, 128
      %119 = vsyncadd [#allocation3], %s118
      %s121 = sshll.u32 [#allocation2], 4
      %s122 = int_to_ptr.vmem [resolvable:$true] %s121
      %124 = dma.vmem_to_hbm [thread:$0]  %s122, 128, %s3, [#allocation3]
    $region17: #{tpu_custom_call.1} parent=1 // pred_fallthru
      _
    // Predicated region
    $region18: #{tpu_custom_call.1} parent=1 // pred_check
      _
    $region19: #{tpu_custom_call.1} parent=1 // pred_check_branch
      %126 = sbr.rel (0) target = $region21
    $region20: #{tpu_custom_call.1} parent=1 // pred_region
      %127 = dma.done [#allocation3], 128
    $region21: #{tpu_custom_call.1} parent=1 // pred_fallthru
      _
    %128 = vsyncpa [#allocation3], 1

</llo_original>
